<compile_context>
chip_gen: v6e
topology: v6e:2x2x1
jax: 0.10.0
libtpu: 0.0.40
codegen_flags: <defaults>
</compile_context>

<pallas_src>
import math

import jax
import jax.numpy as jnp
from jax.experimental import pallas as pl
from jax.experimental.pallas import tpu as pltpu

# ---- static problem sizes (small, consistent with the module's forward) ----
N = 256          # number of pixel samples in the batch (lane axis: 2 x 128)
IN_DIM = 2       # (u, v) pixel coordinates
HIDDEN = 32      # MLP hidden width
OUT_DIM = 3      # RGB

_INV_COUNT = 1.0 / (N * OUT_DIM)          # mean over all rgb elements
_PSNR_SCALE = -10.0 / math.log(10.0)      # fold -10/log(10) at trace time


def _netwrapper_kernel(coords_ref, gt_ref,
                       w1_ref, b1_ref, w2_ref, b2_ref, w3_ref, b3_ref,
                       rgb_ref, mse_ref, psnr_ref):
    """Single-shot: feature-major MLP forward + fused MSE / PSNR."""
    x = coords_ref[...]                                   # (IN_DIM, N) lane-dense

    # ---- Layer 1 (K=2): VPU broadcast-FMAs; an MXU pass would be ~all waste ----
    w1 = w1_ref[...]                                      # (HIDDEN, IN_DIM)
    h = (w1[:, 0:1] * x[0:1, :]
         + w1[:, 1:2] * x[1:2, :]
         + b1_ref[...])                                   # (HIDDEN, N)
    h = jnp.maximum(h, 0.0)

    # ---- Layer 2 (32x32 @ 32xN): MXU ----
    h = jnp.dot(w2_ref[...], h, preferred_element_type=jnp.float32) + b2_ref[...]
    h = jnp.maximum(h, 0.0)

    # ---- Layer 3 (3x32 @ 32xN): MXU ----
    rgb = jnp.dot(w3_ref[...], h, preferred_element_type=jnp.float32) + b3_ref[...]
    rgb_ref[...] = rgb                                    # (OUT_DIM, N) lane-dense store

    # ---- fused MSE + PSNR (vector math, then one scalar write each to SMEM) ----
    diff = rgb - gt_ref[...]
    sse = jnp.sum(diff * diff, axis=1, keepdims=True)     # (OUT_DIM, 1)  lane reduce (XLU)
    sse = jnp.sum(sse, axis=0, keepdims=True)             # (1, 1)        sublane reduce
    mse = sse * _INV_COUNT                                # (1, 1)
    psnr = jnp.log(mse) * _PSNR_SCALE                     # (1, 1)        EUP log
    mse_ref[0] = mse[0, 0]
    psnr_ref[0] = psnr[0, 0]


def _run_pallas(coords_t, rgb_gt_t, w1_t, b1_t, w2_t, b2_t, w3_t, b3_t):
    """coords_t: (IN_DIM, N); rgb_gt_t: (OUT_DIM, N); weights feature-major."""
    vmem = pl.BlockSpec(memory_space=pltpu.MemorySpace.VMEM)
    smem = pl.BlockSpec(memory_space=pltpu.MemorySpace.SMEM)

    rgb_t, mse, psnr = pl.pallas_call(
        _netwrapper_kernel,
        out_shape=(
            jax.ShapeDtypeStruct((OUT_DIM, N), jnp.float32),   # predicted rgb (feature-major)
            jax.ShapeDtypeStruct((1,), jnp.float32),           # color_mse scalar
            jax.ShapeDtypeStruct((1,), jnp.float32),           # psnr scalar
        ),
        in_specs=[vmem] * 8,
        out_specs=(vmem, smem, smem),
    )(coords_t, rgb_gt_t, w1_t, b1_t, w2_t, b2_t, w3_t, b3_t)
    return rgb_t, mse, psnr


def init_params(key):
    """Deterministic synthetic MLP parameters (shapes implied by the image-fit network)."""
    k1, k2, k3 = jax.random.split(key, 3)
    w1 = jax.random.normal(k1, (IN_DIM, HIDDEN), jnp.float32) * 0.5
    b1 = jnp.zeros((1, HIDDEN), jnp.float32)
    w2 = jax.random.normal(k2, (HIDDEN, HIDDEN), jnp.float32) * (1.0 / math.sqrt(HIDDEN))
    b2 = jnp.zeros((1, HIDDEN), jnp.float32)
    w3 = jax.random.normal(k3, (HIDDEN, OUT_DIM), jnp.float32) * (1.0 / math.sqrt(HIDDEN))
    b3 = jnp.zeros((1, OUT_DIM), jnp.float32)
    return (w1, b1, w2, b2, w3, b3)


def network_wrapper_forward(batch, params):
    """Mirrors NetworkWrapper.forward: (output, loss, scalar_stats, image_stats)."""
    w1, b1, w2, b2, w3, b3 = params
    # Wrapper-side transposes = layout plumbing so the kernel is lane-dense.
    rgb_t, mse, psnr = _run_pallas(
        batch["coords"].T, batch["rgb"].T,
        w1.T, b1.T, w2.T, b2.T, w3.T, b3.T)

    rgb_pred = rgb_t.T                     # back to (N, OUT_DIM)
    color_mse = mse.reshape(())            # scalar, like nn.MSELoss(reduction='mean')
    # psnr stays shape (1,) — torch.log(Tensor([10.0])) keeps a size-1 tensor.
    output = {"rgb": rgb_pred}
    loss = color_mse
    scalar_stats = {"color_mse": color_mse, "psnr": psnr, "loss": loss}
    image_stats = {}
    return output, loss, scalar_stats, image_stats


if __name__ == "__main__":
    key = jax.random.PRNGKey(0)
    k_coords, k_rgb, k_params = jax.random.split(key, 3)

    batch = {
        "coords": jax.random.uniform(k_coords, (N, IN_DIM), jnp.float32),
        "rgb": jax.random.uniform(k_rgb, (N, OUT_DIM), jnp.float32),
    }
    params = init_params(k_params)

    output, loss, scalar_stats, image_stats = network_wrapper_forward(batch, params)
    jax.block_until_ready((output, loss, scalar_stats))

    # ---- plain-JAX reference for the forward semantics ----
    w1, b1, w2, b2, w3, b3 = params
    h = jnp.maximum(batch["coords"] @ w1 + b1, 0.0)
    h = jnp.maximum(h @ w2 + b2, 0.0)
    rgb_ref = h @ w3 + b3
    mse_ref = jnp.mean((rgb_ref - batch["rgb"]) ** 2)
    psnr_ref = -10.0 * jnp.log(mse_ref) / jnp.log(10.0)

    assert jnp.allclose(output["rgb"], rgb_ref, atol=1e-3, rtol=1e-3)
    assert jnp.allclose(loss, mse_ref, atol=1e-4, rtol=1e-3)
    assert jnp.allclose(scalar_stats["psnr"], psnr_ref, atol=1e-2, rtol=1e-3)

    print("KERNEL_OK")
</pallas_src>

<mosaic_0001>
module attributes {stable_mosaic.version = 11 : i64} {
  func.func @_netwrapper_kernel(%arg0: memref<2x256xf32, #tpu.memory_space<vmem>>, %arg1: memref<3x256xf32, #tpu.memory_space<vmem>>, %arg2: memref<32x2xf32, #tpu.memory_space<vmem>>, %arg3: memref<32x1xf32, #tpu.memory_space<vmem>>, %arg4: memref<32x32xf32, #tpu.memory_space<vmem>>, %arg5: memref<32x1xf32, #tpu.memory_space<vmem>>, %arg6: memref<3x32xf32, #tpu.memory_space<vmem>>, %arg7: memref<3x1xf32, #tpu.memory_space<vmem>>, %arg8: memref<3x256xf32, #tpu.memory_space<vmem>>, %arg9: memref<1xf32, #tpu.memory_space<smem>>, %arg10: memref<1xf32, #tpu.memory_space<smem>>) attributes {dimension_semantics = [], scalar_prefetch = 0 : i64, scratch_operands = 0 : i64, tpu.core_type = #tpu.core_type<tc>} {
    %c0 = arith.constant 0 : index
    %c0_0 = arith.constant 0 : index
    %0 = vector.load %arg0[%c0, %c0_0] : memref<2x256xf32, #tpu.memory_space<vmem>>, vector<2x256xf32>
    %c0_1 = arith.constant 0 : index
    %c0_2 = arith.constant 0 : index
    %1 = vector.load %arg2[%c0_1, %c0_2] : memref<32x2xf32, #tpu.memory_space<vmem>>, vector<32x2xf32>
    %2 = vector.extract_strided_slice %1 {offsets = [0, 0], sizes = [32, 1], strides = [1, 1]} : vector<32x2xf32> to vector<32x1xf32>
    %3 = vector.extract_strided_slice %0 {offsets = [0, 0], sizes = [1, 256], strides = [1, 1]} : vector<2x256xf32> to vector<1x256xf32>
    %4 = vector.broadcast %2 : vector<32x1xf32> to vector<32x256xf32>
    %5 = vector.broadcast %3 : vector<1x256xf32> to vector<32x256xf32>
    %6 = arith.mulf %4, %5 : vector<32x256xf32>
    %7 = vector.extract_strided_slice %1 {offsets = [0, 1], sizes = [32, 1], strides = [1, 1]} : vector<32x2xf32> to vector<32x1xf32>
    %8 = vector.extract_strided_slice %0 {offsets = [1, 0], sizes = [1, 256], strides = [1, 1]} : vector<2x256xf32> to vector<1x256xf32>
    %9 = vector.broadcast %7 : vector<32x1xf32> to vector<32x256xf32>
    %10 = vector.broadcast %8 : vector<1x256xf32> to vector<32x256xf32>
    %11 = arith.mulf %9, %10 : vector<32x256xf32>
    %12 = arith.addf %6, %11 : vector<32x256xf32>
    %c0_3 = arith.constant 0 : index
    %c0_4 = arith.constant 0 : index
    %13 = vector.load %arg3[%c0_3, %c0_4] : memref<32x1xf32, #tpu.memory_space<vmem>>, vector<32x1xf32>
    %14 = vector.broadcast %13 : vector<32x1xf32> to vector<32x256xf32>
    %15 = arith.addf %12, %14 : vector<32x256xf32>
    %cst = arith.constant 0.000000e+00 : f32
    %16 = vector.broadcast %cst : f32 to vector<32x256xf32>
    %17 = arith.maximumf %15, %16 : vector<32x256xf32>
    %c0_5 = arith.constant 0 : index
    %c0_6 = arith.constant 0 : index
    %18 = vector.load %arg4[%c0_5, %c0_6] : memref<32x32xf32, #tpu.memory_space<vmem>>, vector<32x32xf32>
    %cst_7 = arith.constant dense<0.000000e+00> : vector<32x256xf32>
    %19 = tpu.matmul %18, %17, %cst_7 {dimension_numbers = #tpu.dot_dimension_numbers<[1], [0], [0], [1], [0, 0, 1, 1], [], []>} : vector<32x32xf32>, vector<32x256xf32>, vector<32x256xf32> -> vector<32x256xf32>
    %c0_8 = arith.constant 0 : index
    %c0_9 = arith.constant 0 : index
    %20 = vector.load %arg5[%c0_8, %c0_9] : memref<32x1xf32, #tpu.memory_space<vmem>>, vector<32x1xf32>
    %21 = vector.broadcast %20 : vector<32x1xf32> to vector<32x256xf32>
    %22 = arith.addf %19, %21 : vector<32x256xf32>
    %cst_10 = arith.constant 0.000000e+00 : f32
    %23 = vector.broadcast %cst_10 : f32 to vector<32x256xf32>
    %24 = arith.maximumf %22, %23 : vector<32x256xf32>
    %c0_11 = arith.constant 0 : index
    %c0_12 = arith.constant 0 : index
    %25 = vector.load %arg6[%c0_11, %c0_12] : memref<3x32xf32, #tpu.memory_space<vmem>>, vector<3x32xf32>
    %cst_13 = arith.constant dense<0.000000e+00> : vector<3x256xf32>
    %26 = tpu.matmul %25, %24, %cst_13 {dimension_numbers = #tpu.dot_dimension_numbers<[1], [0], [0], [1], [0, 0, 1, 1], [], []>} : vector<3x32xf32>, vector<32x256xf32>, vector<3x256xf32> -> vector<3x256xf32>
    %c0_14 = arith.constant 0 : index
    %c0_15 = arith.constant 0 : index
    %27 = vector.load %arg7[%c0_14, %c0_15] : memref<3x1xf32, #tpu.memory_space<vmem>>, vector<3x1xf32>
    %28 = vector.broadcast %27 : vector<3x1xf32> to vector<3x256xf32>
    %29 = arith.addf %26, %28 : vector<3x256xf32>
    %c0_16 = arith.constant 0 : index
    %c0_17 = arith.constant 0 : index
    %30 = vector.load %arg8[%c0_16, %c0_17] : memref<3x256xf32, #tpu.memory_space<vmem>>, vector<3x256xf32>
    tpu.vector_store %arg8[%c0_16, %c0_17], %29 {strides = array<i32>} : memref<3x256xf32, #tpu.memory_space<vmem>>, vector<3x256xf32>,
    %c0_18 = arith.constant 0 : index
    %c0_19 = arith.constant 0 : index
    %31 = vector.load %arg1[%c0_18, %c0_19] : memref<3x256xf32, #tpu.memory_space<vmem>>, vector<3x256xf32>
    %32 = arith.subf %29, %31 : vector<3x256xf32>
    %33 = arith.mulf %32, %32 : vector<3x256xf32>
    %cst_20 = arith.constant dense<0.000000e+00> : vector<3xf32>
    %34 = vector.multi_reduction <add>, %33, %cst_20 [1] : vector<3x256xf32> to vector<3xf32>
    %35 = vector.shape_cast %34 : vector<3xf32> to vector<3x1xf32>
    %cst_21 = arith.constant dense<0.000000e+00> : vector<1xf32>
    %36 = vector.multi_reduction <add>, %35, %cst_21 [0] : vector<3x1xf32> to vector<1xf32>
    %37 = vector.shape_cast %36 : vector<1xf32> to vector<1x1xf32>
    %cst_22 = arith.constant 0.00130208337 : f32
    %38 = vector.broadcast %cst_22 : f32 to vector<1x1xf32>
    %39 = arith.mulf %37, %38 : vector<1x1xf32>
    %40 = math.log %39 : vector<1x1xf32>
    %cst_23 = arith.constant -4.34294462 : f32
    %41 = vector.broadcast %cst_23 : f32 to vector<1x1xf32>
    %42 = arith.mulf %40, %41 : vector<1x1xf32>
    %43 = vector.extract %39[0, 0] : f32 from vector<1x1xf32>
    %c0_24 = arith.constant 0 : index
    %44 = memref.load %arg9[%c0_24] : memref<1xf32, #tpu.memory_space<smem>>
    memref.store %43, %arg9[%c0_24] : memref<1xf32, #tpu.memory_space<smem>>
    %45 = vector.extract %42[0, 0] : f32 from vector<1x1xf32>
    %c0_25 = arith.constant 0 : index
    %46 = memref.load %arg10[%c0_25] : memref<1xf32, #tpu.memory_space<smem>>
    memref.store %45, %arg10[%c0_25] : memref<1xf32, #tpu.memory_space<smem>>
    return
  }
}

</mosaic_0001>

<llo_original>
// kernel: tpu_custom_call.1
$region0: #{tpu_custom_call.1}
  #allocation0 [shape = 'u32[]', space=smem, size = 0x4, offset = 0x4, fixed_abs, tag = 'smem constant byte address 0x4 - core index']
  #allocation1 [shape = 'u32[144,128]{1,0:T(1,128)}', space=vmem, size = 0x12000, scoped, tag = 'internal scratch']
  %s0 = inlined_call_operand.vmem [shape: f32[2,256], index: 0, kind: input, shape index: {}]
  %s1 = inlined_call_operand.vmem [shape: f32[3,256], index: 1, kind: input, shape index: {}]
  %s2 = inlined_call_operand.vmem [shape: f32[32,2], index: 2, kind: input, shape index: {}]
  %s3 = inlined_call_operand.vmem [shape: f32[32,1], index: 3, kind: input, shape index: {}]
  %s4 = inlined_call_operand.vmem [shape: f32[32,32], index: 4, kind: input, shape index: {}]
  %s5 = inlined_call_operand.vmem [shape: f32[32,1], index: 5, kind: input, shape index: {}]
  %s6 = inlined_call_operand.vmem [shape: f32[3,32], index: 6, kind: input, shape index: {}]
  %s7 = inlined_call_operand.vmem [shape: f32[3,1], index: 7, kind: input, shape index: {}]
  %s8 = inlined_call_operand.hbm [shape: f32[3,256], index: 8, kind: output, shape index: {0}]
  %s9 = inlined_call_operand.hbm [shape: f32[1], index: 9, kind: output, shape index: {1}]
  %s10 = inlined_call_operand.hbm [shape: f32[1], index: 10, kind: output, shape index: {2}]
  %11 = xla_tuple %s8, %s9, %s10
  %s12 = sld [smem:[#allocation0]]
  $region58: #{tpu_custom_call.1} parent=0
    _
  %s14 = ssub.s32 1, %s12
  %s15 = scalar_select 0, %s14, %s12
  $region1: #{tpu_custom_call.1} parent=0
    #allocation2 [shape = 'u8[4096]{0}', space=vmem, size = 0x1000, scoped, tag = 'output window, operand 0, single buffered']
    #allocation3 [shape = 's32[1]{0}', space=sflag, size = 0x4, scoped, tag = 'scoped memory for tpu_custom_call.1']
    #allocation4 [shape = 's32[1]{0}', space=sflag, size = 0x4, scoped, tag = 'scoped memory for tpu_custom_call.1']
    #allocation5 [shape = 'u8[512]{0}', space=smem, size = 0x200, scoped, tag = 'output window, operand 1, single buffered']
    #allocation6 [shape = 'u8[512]{0}', space=smem, size = 0x200, scoped, tag = 'output window, operand 2, single buffered']
    #allocation7 [shape = 's32[1]{0}', space=sflag, size = 0x4, scoped, tag = 'scoped memory for tpu_custom_call.1']
    %16 = vsyncpa [#allocation3], 0
    %17 = vsyncpa [#allocation4], 0
    %18 = vsyncpa [#allocation7], 0
    // Predicated region
    $region2: #{tpu_custom_call.1} parent=1 // pred_check
      _
    $region3: #{tpu_custom_call.1} parent=1 // pred_check_branch
      %20 = sbr.rel (0) target = $region5
    $region4: #{tpu_custom_call.1} parent=1 // pred_region
      _
    $region5: #{tpu_custom_call.1} parent=1 // pred_fallthru
      _
    // Predicated region
    $region6: #{tpu_custom_call.1} parent=1 // pred_check
      _
    $region7: #{tpu_custom_call.1} parent=1 // pred_check_branch
      %22 = sbr.rel (0) target = $region9
    $region8: #{tpu_custom_call.1} parent=1 // pred_region
      _
    $region9: #{tpu_custom_call.1} parent=1 // pred_fallthru
      _
    // Predicated region
    $region10: #{tpu_custom_call.1} parent=1 // pred_check
      _
    $region11: #{tpu_custom_call.1} parent=1 // pred_check_branch
      %24 = sbr.rel (0) target = $region13
    $region12: #{tpu_custom_call.1} parent=1 // pred_region
      _
    $region13: #{tpu_custom_call.1} parent=1 // pred_fallthru
      _
    // Predicated region
    $region14: #{tpu_custom_call.1} parent=1 // pred_check
      _
    $region15: #{tpu_custom_call.1} parent=1 // pred_check_branch
      %26 = sbr.rel (0) target = $region17
    $region16: #{tpu_custom_call.1} parent=1 // pred_region
      _
    $region17: #{tpu_custom_call.1} parent=1 // pred_fallthru
      _
    // Predicated region
    $region18: #{tpu_custom_call.1} parent=1 // pred_check
      _
    $region19: #{tpu_custom_call.1} parent=1 // pred_check_branch
      %28 = sbr.rel (0) target = $region21
    $region20: #{tpu_custom_call.1} parent=1 // pred_region
      _
    $region21: #{tpu_custom_call.1} parent=1 // pred_fallthru
      _
    // Predicated region
    $region22: #{tpu_custom_call.1} parent=1 // pred_check
      _
    $region23: #{tpu_custom_call.1} parent=1 // pred_check_branch
      %30 = sbr.rel (0) target = $region25
    $region24: #{tpu_custom_call.1} parent=1 // pred_region
      _
    $region25: #{tpu_custom_call.1} parent=1 // pred_fallthru
      _
    // Predicated region
    $region26: #{tpu_custom_call.1} parent=1 // pred_check
      _
    $region27: #{tpu_custom_call.1} parent=1 // pred_check_branch
      %32 = sbr.rel (0) target = $region29
    $region28: #{tpu_custom_call.1} parent=1 // pred_region
      _
    $region29: #{tpu_custom_call.1} parent=1 // pred_fallthru
      _
    // Predicated region
    $region30: #{tpu_custom_call.1} parent=1 // pred_check
      _
    $region31: #{tpu_custom_call.1} parent=1 // pred_check_branch
      %34 = sbr.rel (0) target = $region33
    $region32: #{tpu_custom_call.1} parent=1 // pred_region
      _
    $region33: #{tpu_custom_call.1} parent=1 // pred_fallthru
      _
    %v35 = vld [vmem:[%s0] sm:$0xf]
    %v36 = vld [vmem:[%s2] sm:$0xff]
    %v37 = vld [vmem:[%s2 + $0x8] sm:$0xff]
    %v38 = vld [vmem:[%s2 + $0x10] sm:$0xff]
    %v39 = vld [vmem:[%s2 + $0x18] sm:$0xff]
    %41 = vset.pattern.permute.xlu0 0
    %42 = vperm.xlu0 %41, %v36
    %v43 = vpop.permute.xlu0 %42
    %46 = vset.pattern.permute.xlu0 0
    %47 = vperm.xlu0 %46, %v37
    %v48 = vpop.permute.xlu0 %47
    %51 = vset.pattern.permute.xlu0 0
    %52 = vperm.xlu0 %51, %v38
    %v53 = vpop.permute.xlu0 %52
    %56 = vset.pattern.permute.xlu0 0
    %57 = vperm.xlu0 %56, %v39
    %v58 = vpop.permute.xlu0 %57
    %v61 = vlaneseq
    %v62 = vshrl.u32 %v61, 7
    %v63 = vsub.s32 0, %v62
    %v64 = vrot.slane %v35, %v63
    %v65 = vlaneseq
    %v66 = vshrl.u32 %v65, 7
    %v67 = vsub.s32 2, %v66
    %v68 = vrot.slane %v35, %v67
    %v71 = vlaneseq
    %v72 = vshrl.u32 %v71, 7
    %v73 = vsub.s32 0, %v72
    %v74 = vrot.slane %v64, %v73
    %v75 = vlaneseq
    %v76 = vshrl.u32 %v75, 7
    %v77 = vsub.s32 0, %v76
    %v78 = vrot.slane %v68, %v77
    %v79 = vmul.f32 %v43, %v74
    %v80 = vmul.f32 %v43, %v78
    %v81 = vmul.f32 %v48, %v74
    %v82 = vmul.f32 %v48, %v78
    %v83 = vmul.f32 %v53, %v74
    %v84 = vmul.f32 %v53, %v78
    %v85 = vmul.f32 %v58, %v74
    %v86 = vmul.f32 %v58, %v78
    %87 = vset.pattern.permute.xlu0 1
    %88 = vperm.xlu0 %87, %v36
    %v89 = vpop.permute.xlu0 %88
    %91 = vset.pattern.permute.xlu0 1
    %92 = vperm.xlu0 %91, %v37
    %v93 = vpop.permute.xlu0 %92
    %95 = vset.pattern.permute.xlu0 1
    %96 = vperm.xlu0 %95, %v38
    %v97 = vpop.permute.xlu0 %96
    %99 = vset.pattern.permute.xlu0 1
    %100 = vperm.xlu0 %99, %v39
    %v101 = vpop.permute.xlu0 %100
    %v103 = vlaneseq
    %v104 = vshrl.u32 %v103, 7
    %v105 = vsub.s32 1, %v104
    %v106 = vrot.slane %v35, %v105
    %v107 = vlaneseq
    %v108 = vshrl.u32 %v107, 7
    %v109 = vsub.s32 3, %v108
    %v110 = vrot.slane %v35, %v109
    %v113 = vlaneseq
    %v114 = vshrl.u32 %v113, 7
    %v115 = vsub.s32 1, %v114
    %v116 = vrot.slane %v106, %v115
    %v117 = vlaneseq
    %v118 = vshrl.u32 %v117, 7
    %v119 = vsub.s32 1, %v118
    %v120 = vrot.slane %v110, %v119
    %v121 = vmul.f32 %v89, %v116
    %v122 = vmul.f32 %v89, %v120
    %v123 = vmul.f32 %v93, %v116
    %v124 = vmul.f32 %v93, %v120
    %v125 = vmul.f32 %v97, %v116
    %v126 = vmul.f32 %v97, %v120
    %v127 = vmul.f32 %v101, %v116
    %v128 = vmul.f32 %v101, %v120
    %v129 = vadd.f32 %v79, %v121
    %v130 = vadd.f32 %v80, %v122
    %v131 = vadd.f32 %v81, %v123
    %v132 = vadd.f32 %v82, %v124
    %v133 = vadd.f32 %v83, %v125
    %v134 = vadd.f32 %v84, %v126
    %v135 = vadd.f32 %v85, %v127
    %v136 = vadd.f32 %v86, %v128
    %v137 = vld [vmem:[%s3] sm:$0xff]
    %v138 = vld [vmem:[%s3 + $0x8] sm:$0xff]
    %v139 = vld [vmem:[%s3 + $0x10] sm:$0xff]
    %v140 = vld [vmem:[%s3 + $0x18] sm:$0xff]
    %142 = vset.pattern.permute.xlu0 0
    %143 = vperm.xlu0 %142, %v137
    %v144 = vpop.permute.xlu0 %143
    %147 = vset.pattern.permute.xlu0 0
    %148 = vperm.xlu0 %147, %v138
    %v149 = vpop.permute.xlu0 %148
    %152 = vset.pattern.permute.xlu0 0
    %153 = vperm.xlu0 %152, %v139
    %v154 = vpop.permute.xlu0 %153
    %157 = vset.pattern.permute.xlu0 0
    %158 = vperm.xlu0 %157, %v140
    %v159 = vpop.permute.xlu0 %158
    %v161 = vadd.f32 %v129, %v144
    %v162 = vadd.f32 %v130, %v144
    %v163 = vadd.f32 %v131, %v149
    %v164 = vadd.f32 %v132, %v149
    %v165 = vadd.f32 %v133, %v154
    %v166 = vadd.f32 %v134, %v154
    %v167 = vadd.f32 %v135, %v159
    %v168 = vadd.f32 %v136, %v159
    %v169 = vmax.f32 %v161, 0.0
    %v170 = vmax.f32 %v162, 0.0
    %v171 = vmax.f32 %v163, 0.0
    %v172 = vmax.f32 %v164, 0.0
    %v173 = vmax.f32 %v165, 0.0
    %v174 = vmax.f32 %v166, 0.0
    %v175 = vmax.f32 %v167, 0.0
    %v176 = vmax.f32 %v168, 0.0
    %v177 = vld [vmem:[%s4] sm:$0xff]
    %v178 = vld [vmem:[%s4 + $0x8] sm:$0xff]
    %v179 = vld [vmem:[%s4 + $0x10] sm:$0xff]
    %v180 = vld [vmem:[%s4 + $0x18] sm:$0xff]
    %v181 = vld [vmem:[%s5] sm:$0xff]
    %v182 = vld [vmem:[%s5 + $0x8] sm:$0xff]
    %v183 = vld [vmem:[%s5 + $0x10] sm:$0xff]
    %v184 = vld [vmem:[%s5 + $0x18] sm:$0xff]
    %186 = vset.pattern.permute.xlu0 0
    %187 = vperm.xlu0 %186, %v181
    %v188 = vpop.permute.xlu0 %187
    %191 = vset.pattern.permute.xlu0 0
    %192 = vperm.xlu0 %191, %v182
    %v193 = vpop.permute.xlu0 %192
    %196 = vset.pattern.permute.xlu0 0
    %197 = vperm.xlu0 %196, %v183
    %v198 = vpop.permute.xlu0 %197
    %201 = vset.pattern.permute.xlu0 0
    %202 = vperm.xlu0 %201, %v184
    %v203 = vpop.permute.xlu0 %202
    %vm205 = vcmask 261120
    %v207 = vsel %vm205, %v177, 0
    %v210 = vsel %vm205, %v178, 0
    %v213 = vsel %vm205, %v179, 0
    %v216 = vsel %vm205, %v180, 0
    %218 = vmatprep.subr.mxu0 0.0
    %219 = vmatpush1.msra.mxu0 0.0
    %220 = vmatprep.subr.mxu0 0.0
    %221 = vmatpush1.msra.mxu0 0.0
    %222 = vmatprep.subr.mxu0 0.0
    %223 = vmatpush1.msra.mxu0 0.0
    %224 = vmatprep.subr.mxu0 0.0
    %225 = vmatpush1.msra.mxu0 0.0
    %226 = vmatprep.subr.mxu0 0.0
    %227 = vmatpush1.msra.mxu0 0.0
    %228 = vmatprep.subr.mxu0 0.0
    %229 = vmatpush1.msra.mxu0 0.0
    %230 = vmatprep.subr.mxu0 0.0
    %231 = vmatpush1.msra.mxu0 0.0
    %232 = vmatprep.subr.mxu0 0.0
    %233 = vmatpush1.msra.mxu0 0.0
    %234 = vmatprep.subr.mxu0 0.0
    %235 = vmatpush1.msra.mxu0 0.0
    %236 = vmatprep.subr.mxu0 0.0
    %237 = vmatpush1.msra.mxu0 0.0
    %238 = vmatprep.subr.mxu0 0.0
    %239 = vmatpush1.msra.mxu0 0.0
    %240 = vmatprep.subr.mxu0 0.0
    %241 = vmatpush1.msra.mxu0 0.0
    %242 = vmatprep.subr.mxu0 %v176
    %243 = vmatpush1.msra.mxu0 %v175
    %244 = vmatprep.subr.mxu0 %v174
    %245 = vmatpush1.msra.mxu0 %v173
    %246 = vmatprep.subr.mxu0 %v172
    %247 = vmatpush1.msra.mxu0 %v171
    %248 = vmatprep.subr.mxu0 %v170
    %249 = vmatpush1.msra.mxu0 %v169
    %250 = vmatprep.subr.mxu0 0.0
    %251 = vmatpush2.msra.mxu0 0.0
    %252 = vmatprep.subr.mxu0 0.0
    %253 = vmatpush2.msra.mxu0 0.0
    %254 = vmatprep.subr.mxu0 0.0
    %255 = vmatpush2.msra.mxu0 0.0
    %256 = vmatprep.subr.mxu0 0.0
    %257 = vmatpush2.msra.mxu0 0.0
    %258 = vmatprep.subr.mxu0 0.0
    %259 = vmatpush2.msra.mxu0 0.0
    %260 = vmatprep.subr.mxu0 0.0
    %261 = vmatpush2.msra.mxu0 0.0
    %262 = vmatprep.subr.mxu0 0.0
    %263 = vmatpush2.msra.mxu0 0.0
    %264 = vmatprep.subr.mxu0 0.0
    %265 = vmatpush2.msra.mxu0 0.0
    %266 = vmatprep.subr.mxu0 0.0
    %267 = vmatpush2.msra.mxu0 0.0
    %268 = vmatprep.subr.mxu0 0.0
    %269 = vmatpush2.msra.mxu0 0.0
    %270 = vmatprep.subr.mxu0 0.0
    %271 = vmatpush2.msra.mxu0 0.0
    %272 = vmatprep.subr.mxu0 0.0
    %273 = vmatpush2.msra.mxu0 0.0
    %274 = vmatprep.subr.mxu0 0.0
    %275 = vmatpush2.msra.mxu0 0.0
    %276 = vmatprep.subr.mxu0 0.0
    %277 = vmatpush2.msra.mxu0 0.0
    %278 = vmatprep.subr.mxu0 0.0
    %279 = vmatpush2.msra.mxu0 0.0
    %280 = vmatprep.subr.mxu0 0.0
    %281 = vmatpush2.msra.mxu0 0.0
    %282 = vmatprep.mubr.f32.mxu0 0.0
    %283 = vmatmul.mubr.f32.gmra.mxu0 %v207
    %v284 = vpop.f32.mrf.mxu0
    %v285 = vadd.f32 %v188, %v284
    %v286 = vpop.f32.mrf.mxu0
    %v287 = vadd.f32 %v188, %v286
    %288 = vmatprep.mubr.f32.mxu0 0.0
    %289 = vmatmul.mubr.f32.gmra.mxu0 %v210
    %v290 = vpop.f32.mrf.mxu0
    %v291 = vadd.f32 %v193, %v290
    %v292 = vpop.f32.mrf.mxu0
    %v293 = vadd.f32 %v193, %v292
    %294 = vmatprep.mubr.f32.mxu0 0.0
    %295 = vmatmul.mubr.f32.gmra.mxu0 %v213
    %v296 = vpop.f32.mrf.mxu0
    %v297 = vadd.f32 %v198, %v296
    %v298 = vpop.f32.mrf.mxu0
    %v299 = vadd.f32 %v198, %v298
    %300 = vmatprep.mubr.f32.mxu0 0.0
    %301 = vmatmul.mubr.f32.gmra.mxu0 %v216
    %v302 = vpop.f32.mrf.mxu0
    %v303 = vadd.f32 %v203, %v302
    %v304 = vpop.f32.mrf.mxu0
    %v305 = vadd.f32 %v203, %v304
    %306 = vdwg.mxu0
    %v307 = vmax.f32 %v285, 0.0
    %v308 = vmax.f32 %v287, 0.0
    %v309 = vmax.f32 %v291, 0.0
    %v310 = vmax.f32 %v293, 0.0
    %v311 = vmax.f32 %v297, 0.0
    %v312 = vmax.f32 %v299, 0.0
    %v313 = vmax.f32 %v303, 0.0
    %v314 = vmax.f32 %v305, 0.0
    %v315 = vld [vmem:[%s6] sm:$0x7]
    %v316 = vld [vmem:[%s7] sm:$0x7]
    %318 = vset.pattern.permute.xlu0 0
    %319 = vperm.xlu0 %318, %v316
    %v320 = vpop.permute.xlu0 %319
    %v323 = vsel %vm205, %v315, 0
    %325 = vmatprep.subr.mxu0 0.0
    %326 = vmatpush1.msra.mxu0 0.0
    %327 = vmatprep.subr.mxu0 0.0
    %328 = vmatpush1.msra.mxu0 0.0
    %329 = vmatprep.subr.mxu0 0.0
    %330 = vmatpush1.msra.mxu0 0.0
    %331 = vmatprep.subr.mxu0 0.0
    %332 = vmatpush1.msra.mxu0 0.0
    %333 = vmatprep.subr.mxu0 0.0
    %334 = vmatpush1.msra.mxu0 0.0
    %335 = vmatprep.subr.mxu0 0.0
    %336 = vmatpush1.msra.mxu0 0.0
    %337 = vmatprep.subr.mxu0 0.0
    %338 = vmatpush1.msra.mxu0 0.0
    %339 = vmatprep.subr.mxu0 0.0
    %340 = vmatpush1.msra.mxu0 0.0
    %341 = vmatprep.subr.mxu0 0.0
    %342 = vmatpush1.msra.mxu0 0.0
    %343 = vmatprep.subr.mxu0 0.0
    %344 = vmatpush1.msra.mxu0 0.0
    %345 = vmatprep.subr.mxu0 0.0
    %346 = vmatpush1.msra.mxu0 0.0
    %347 = vmatprep.subr.mxu0 0.0
    %348 = vmatpush1.msra.mxu0 0.0
    %349 = vmatprep.subr.mxu0 %v314
    %350 = vmatpush1.msra.mxu0 %v313
    %351 = vmatprep.subr.mxu0 %v312
    %352 = vmatpush1.msra.mxu0 %v311
    %353 = vmatprep.subr.mxu0 %v310
    %354 = vmatpush1.msra.mxu0 %v309
    %355 = vmatprep.subr.mxu0 %v308
    %356 = vmatpush1.msra.mxu0 %v307
    %357 = vmatprep.subr.mxu0 0.0
    %358 = vmatpush2.msra.mxu0 0.0
    %359 = vmatprep.subr.mxu0 0.0
    %360 = vmatpush2.msra.mxu0 0.0
    %361 = vmatprep.subr.mxu0 0.0
    %362 = vmatpush2.msra.mxu0 0.0
    %363 = vmatprep.subr.mxu0 0.0
    %364 = vmatpush2.msra.mxu0 0.0
    %365 = vmatprep.subr.mxu0 0.0
    %366 = vmatpush2.msra.mxu0 0.0
    %367 = vmatprep.subr.mxu0 0.0
    %368 = vmatpush2.msra.mxu0 0.0
    %369 = vmatprep.subr.mxu0 0.0
    %370 = vmatpush2.msra.mxu0 0.0
    %371 = vmatprep.subr.mxu0 0.0
    %372 = vmatpush2.msra.mxu0 0.0
    %373 = vmatprep.subr.mxu0 0.0
    %374 = vmatpush2.msra.mxu0 0.0
    %375 = vmatprep.subr.mxu0 0.0
    %376 = vmatpush2.msra.mxu0 0.0
    %377 = vmatprep.subr.mxu0 0.0
    %378 = vmatpush2.msra.mxu0 0.0
    %379 = vmatprep.subr.mxu0 0.0
    %380 = vmatpush2.msra.mxu0 0.0
    %381 = vmatprep.subr.mxu0 0.0
    %382 = vmatpush2.msra.mxu0 0.0
    %383 = vmatprep.subr.mxu0 0.0
    %384 = vmatpush2.msra.mxu0 0.0
    %385 = vmatprep.subr.mxu0 0.0
    %386 = vmatpush2.msra.mxu0 0.0
    %387 = vmatprep.subr.mxu0 0.0
    %388 = vmatpush2.msra.mxu0 0.0
    %389 = vmatprep.mubr.f32.mxu0 0.0
    %390 = vmatmul.mubr.f32.gmra.mxu0 %v323
    %v391 = vpop.f32.mrf.mxu0
    %v392 = vadd.f32 %v320, %v391
    %v393 = vpop.f32.mrf.mxu0
    %v394 = vadd.f32 %v320, %v393
    %395 = vdwg.mxu0
    %v398 = vcombine.low %v392, %v394
    %400 = vst [vmem:[#allocation2] sm:$0x77] %v398
    %v401 = vld [vmem:[%s1] sm:$0x77]
    %v403 = vcombine.high %v401, %v401
    %v405 = vsub.f32 %v392, %v401
    %v406 = vsub.f32 %v394, %v403
    %v407 = vmul.f32 %v405, %v405
    %v408 = vmul.f32 %v406, %v406
    %vm409 = vcmask 1042432
    %v410 = vsel %vm409, %v407, 0.0
    %v411 = vsel %vm409, %v408, 0.0
    %v412 = vadd.f32 %v410, %v411
    %413 = vadd.xlane.f32.xlu0 %v412
    %v414 = vpop.xlane.xlu0 %413
    %v415 = vsel %vm409, %v414, 0.0
    %v416 = vrot.slane %v415, 4
    %v417 = vadd.f32 %v415, %v416
    %v418 = vrot.slane %v417, 2
    %v419 = vadd.f32 %v417, %v418
    %v420 = vrot.slane %v419, 1
    %v421 = vadd.f32 %v419, %v420
    %v422 = vmul.f32 %v421, 0.0013020834
    %v423 = vlog2.pop %v422
    %v424 = vmul.f32 %v423, 0.6931472
    %v425 = vmul.f32 %v424, -4.3429446
    %s426 = vtos %v422
    %s427 = scalar_lea.smem [#allocation5], 0
    %428 = sst [smem:[%s427]] %s426
    %s429 = vtos %v425
    %s430 = scalar_lea.smem [#allocation6], 0
    %431 = sst [smem:[%s430]] %s429
    // Predicated region
    $region34: #{tpu_custom_call.1} parent=1 // pred_check
      _
    $region35: #{tpu_custom_call.1} parent=1 // pred_check_branch
      %433 = sbr.rel (0) target = $region37
    $region36: #{tpu_custom_call.1} parent=1 // pred_region
      %s435 = ssub.s32 128, 128
      %436 = vsyncadd [#allocation3], %s435
      %s438 = sshll.u32 [#allocation2], 4
      %s439 = int_to_ptr.vmem [resolvable:$true] %s438
      %441 = dma.vmem_to_hbm [thread:$0]  %s439, 128, %s8, [#allocation3]
    $region37: #{tpu_custom_call.1} parent=1 // pred_fallthru
      _
    // Predicated region
    $region38: #{tpu_custom_call.1} parent=1 // pred_check
      _
    $region39: #{tpu_custom_call.1} parent=1 // pred_check_branch
      %443 = sbr.rel (0) target = $region41
    $region40: #{tpu_custom_call.1} parent=1 // pred_region
      %s445 = ssub.s32 16, 16
      %446 = vsyncadd [#allocation4], %s445
      %449 = dma.smem_to_hbm [#allocation5], 16, %s9, [#allocation4]
    $region41: #{tpu_custom_call.1} parent=1 // pred_fallthru
      _
    // Predicated region
    $region42: #{tpu_custom_call.1} parent=1 // pred_check
      _
    $region43: #{tpu_custom_call.1} parent=1 // pred_check_branch
      %451 = sbr.rel (0) target = $region45
    $region44: #{tpu_custom_call.1} parent=1 // pred_region
      %s453 = ssub.s32 16, 16
      %454 = vsyncadd [#allocation7], %s453
      %457 = dma.smem_to_hbm [#allocation6], 16, %s10, [#allocation7]
    $region45: #{tpu_custom_call.1} parent=1 // pred_fallthru
      _
    // Predicated region
    $region46: #{tpu_custom_call.1} parent=1 // pred_check
      _
    $region47: #{tpu_custom_call.1} parent=1 // pred_check_branch
      %459 = sbr.rel (0) target = $region49
    $region48: #{tpu_custom_call.1} parent=1 // pred_region
      %460 = dma.done [#allocation3], 128
    $region49: #{tpu_custom_call.1} parent=1 // pred_fallthru
      _
    // Predicated region
    $region50: #{tpu_custom_call.1} parent=1 // pred_check
      _
    $region51: #{tpu_custom_call.1} parent=1 // pred_check_branch
      %462 = sbr.rel (0) target = $region53
    $region52: #{tpu_custom_call.1} parent=1 // pred_region
      %463 = dma.done [#allocation4], 16
    $region53: #{tpu_custom_call.1} parent=1 // pred_fallthru
      _
    // Predicated region
    $region54: #{tpu_custom_call.1} parent=1 // pred_check
      _
    $region55: #{tpu_custom_call.1} parent=1 // pred_check_branch
      %465 = sbr.rel (0) target = $region57
    $region56: #{tpu_custom_call.1} parent=1 // pred_region
      %466 = dma.done [#allocation7], 16
    $region57: #{tpu_custom_call.1} parent=1 // pred_fallthru
      _
    %467 = sfence
    %468 = vsyncpa [#allocation3], 1
    %469 = vsyncpa [#allocation4], 1
    %470 = vsyncpa [#allocation7], 1

</llo_original>
